<compile_context>
chip_gen: v7x
topology: tpu7x:2x2x1
jax: 0.10.0
libtpu: 0.0.40
codegen_flags: <defaults>
</compile_context>

<pallas_src>
import jax
import jax.numpy as jnp
from jax.experimental import pallas as pl
from jax.experimental.pallas import tpu as pltpu

_SUBLANE = 8
_LANE = 128
_TOKEN_TILE = 256
_MAX_RESIDENT_TABLE_BYTES = 32 * 1024 * 1024  # safe on v5e/v6e/v7x


def _round_up(x: int, m: int) -> int:
    return (x + m - 1) // m * m


def _embedding_onehot_kernel(ids_ref, w_ref, o_ref):
    # ids_ref: VMEM (T, 1)  int32  -- shard-local token ids for this tile
    # w_ref:   VMEM (Vp, Dp)       -- full padded sharded table, VMEM-resident
    # o_ref:   VMEM (T, Dp)        -- dense output tile (sublane+lane dense)
    t = ids_ref.shape[0]
    vp = w_ref.shape[0]

    ids = ids_ref[...]                                          # (T, 1)
    vocab_iota = jax.lax.broadcasted_iota(jnp.int32, (t, vp), 1)
    # one_hot[t, v] = (ids[t] == v).  Out-of-range ids (out-of-shard tokens in
    # the world_size>1 case) match no column -> zero output row.
    onehot = (ids == vocab_iota).astype(w_ref.dtype)            # (T, Vp)

    # Exact row gather via the MXU: exactly one nonzero term per output row.
    o_ref[...] = jnp.dot(
        onehot,
        w_ref[...],
        preferred_element_type=jnp.float32,
        precision=jax.lax.Precision.HIGHEST,
    ).astype(o_ref.dtype)


def parallel_embedding(x: jax.Array, weight: jax.Array, *,
                       vocab_start_idx: int = 0,
                       token_tile: int = _TOKEN_TILE) -> jax.Array:
    """y[..., :] = weight[x[...] - vocab_start_idx]  (world_size == 1 path).

    x: integer token ids, any shape. weight: (part_vocab_size, dim).
    Out-of-shard ids produce zero rows (matching the reference masking).
    """
    part_vocab, dim = weight.shape
    orig_shape = x.shape
    out_dtype = weight.dtype
    itemsize = jnp.dtype(out_dtype).itemsize

    ids = x.reshape(-1).astype(jnp.int32) - vocab_start_idx
    num_tokens = ids.shape[0]

    # Pad the table to (sublane, lane) multiples; padded rows/cols are zero and
    # never selected by in-range ids.
    vp = _round_up(part_vocab, _SUBLANE)
    dp = _round_up(dim, _LANE)
    w = weight
    if (vp, dp) != (part_vocab, dim):
        w = jnp.pad(weight, ((0, vp - part_vocab), (0, dp - dim)))

    table_bytes = vp * dp * itemsize
    if table_bytes > _MAX_RESIDENT_TABLE_BYTES:
        # TODO(synk): streaming HBM manual-DMA gather path for huge tables.
        raise NotImplementedError("sharded table too large for VMEM-resident path")

    # Token tile: large enough to be sublane-dense and amortize per-step cost.
    if num_tokens >= token_tile:
        t_tile = token_tile
    else:
        t_tile = _round_up(num_tokens, _SUBLANE)
    num_padded = _round_up(num_tokens, t_tile)
    if num_padded != num_tokens:
        ids = jnp.pad(ids, (0, num_padded - num_tokens))  # pad rows sliced off below
    ids2 = ids.reshape(num_padded, 1)
    num_tiles = num_padded // t_tile

    # Explicit VMEM budget (table kept resident + double-buffered tiles +
    # one-hot intermediate), with headroom; capped well below v7x's 64 MiB.
    needed = (2 * table_bytes
              + 2 * t_tile * dp * itemsize
              + 2 * t_tile * 4
              + t_tile * vp * 4)
    vmem_limit = int(min(max(4 * needed, 32 << 20), 48 << 20))

    out_bytes = num_padded * dp * itemsize
    cost = pl.CostEstimate(
        flops=2 * num_padded * vp * dp,
        transcendentals=0,
        bytes_accessed=num_padded * 4 + table_bytes + out_bytes,
    )

    out = pl.pallas_call(
        _embedding_onehot_kernel,
        out_shape=jax.ShapeDtypeStruct((num_padded, dp), out_dtype),
        grid_spec=pltpu.PrefetchScalarGridSpec(
            num_scalar_prefetch=0,
            grid=(num_tiles,),
            in_specs=[
                # Token-id tile: (T, 1) int32 (T multiple of 8, last dim full).
                pl.BlockSpec((t_tile, 1), lambda i: (i, 0)),
                # Full table, constant index -> DMA'd once, stays VMEM-resident.
                pl.BlockSpec((vp, dp), lambda i: (0, 0)),
            ],
            out_specs=pl.BlockSpec((t_tile, dp), lambda i: (i, 0)),
        ),
        compiler_params=pltpu.CompilerParams(
            dimension_semantics=("parallel",),
            vmem_limit_bytes=vmem_limit,
        ),
        cost_estimate=cost,
    )(ids2, w)

    out = out[:num_tokens, :dim]
    return out.reshape(*orig_shape, dim)


if __name__ == "__main__":
    # Module config: ParallelEmbedding(vocab_size=128, dim=256), world_size=1.
    vocab_size, dim = 128, 256
    batch, seq = 2, 8
    world_size, rank = 1, 0
    part_vocab_size = vocab_size // world_size
    vocab_start_idx = rank * part_vocab_size

    key = jax.random.PRNGKey(0)
    k_ids, k_w = jax.random.split(key)
    x = jax.random.randint(k_ids, (batch, seq), 0, vocab_size, dtype=jnp.int32)
    # Deterministic parameter init (torch.empty is uninitialized -> use normal).
    weight = jax.random.normal(k_w, (part_vocab_size, dim), dtype=jnp.float32)

    y = parallel_embedding(x, weight, vocab_start_idx=vocab_start_idx)
    y = jax.block_until_ready(y)

    # Pure-JAX reference: F.embedding == row gather.
    ref = jnp.take(weight, x.reshape(-1), axis=0).reshape(batch, seq, dim)
    assert y.shape == (batch, seq, dim)
    assert jnp.array_equal(y, ref), "mismatch vs reference"

    print("KERNEL_OK")
</pallas_src>

<mosaic_0001>
module attributes {stable_mosaic.version = 11 : i64} {
  func.func @_embedding_onehot_kernel(%arg0: i32, %arg1: memref<16x1xi32, #tpu.memory_space<vmem>>, %arg2: memref<128x256xf32, #tpu.memory_space<vmem>>, %arg3: memref<16x256xf32, #tpu.memory_space<vmem>>) attributes {dimension_semantics = [#tpu.dimension_semantics<parallel>], iteration_bounds = array<i64: 1>, scalar_prefetch = 0 : i64, scratch_operands = 0 : i64, tpu.core_type = #tpu.core_type<tc>, window_params = [{transform_indices = @transform_0, window_bounds = array<i64: 16, 1>}, {pipeline_mode = #tpu.pipeline_mode<synchronous>, transform_indices = @transform_1, window_bounds = array<i64: 128, 256>}, {transform_indices = @transform_2, window_bounds = array<i64: 16, 256>}]} {
    %c0 = arith.constant 0 : index
    %c0_0 = arith.constant 0 : index
    %0 = vector.load %arg1[%c0, %c0_0] : memref<16x1xi32, #tpu.memory_space<vmem>>, vector<16x1xi32>
    %1 = tpu.iota {dimensions = array<i32: 1>} : vector<16x128xi32>
    %2 = vector.broadcast %0 : vector<16x1xi32> to vector<16x128xi32>
    %3 = arith.cmpi eq, %2, %1 : vector<16x128xi32>
    %4 = arith.extui %3 : vector<16x128xi1> to vector<16x128xi32>
    %5 = arith.sitofp %4 : vector<16x128xi32> to vector<16x128xf32>
    %c0_1 = arith.constant 0 : index
    %c0_2 = arith.constant 0 : index
    %6 = vector.load %arg2[%c0_1, %c0_2] : memref<128x256xf32, #tpu.memory_space<vmem>>, vector<128x256xf32>
    %cst = arith.constant dense<0.000000e+00> : vector<16x256xf32>
    %7 = tpu.matmul %5, %6, %cst {dimension_numbers = #tpu.dot_dimension_numbers<[1], [0], [0], [1], [0, 0, 1, 1], [], []>, precision = #tpu.contract_precision<fp32>} : vector<16x128xf32>, vector<128x256xf32>, vector<16x256xf32> -> vector<16x256xf32>
    %c0_3 = arith.constant 0 : index
    %c0_4 = arith.constant 0 : index
    %8 = vector.load %arg3[%c0_3, %c0_4] : memref<16x256xf32, #tpu.memory_space<vmem>>, vector<16x256xf32>
    tpu.vector_store %arg3[%c0_3, %c0_4], %7 {strides = array<i32>} : memref<16x256xf32, #tpu.memory_space<vmem>>, vector<16x256xf32>,
    return
  }
  func.func @transform_0(%arg0: i32) -> (i32, i32) {
    %c0_i32 = arith.constant 0 : i32
    %c0_i32_0 = arith.constant 0 : i32
    return %arg0, %c0_i32 : i32, i32
  }
  func.func @transform_1(%arg0: i32) -> (i32, i32) {
    %c0_i32 = arith.constant 0 : i32
    %c0_i32_0 = arith.constant 0 : i32
    %c0_i32_1 = arith.constant 0 : i32
    return %c0_i32, %c0_i32_0 : i32, i32
  }
  func.func @transform_2(%arg0: i32) -> (i32, i32) {
    %c0_i32 = arith.constant 0 : i32
    %c0_i32_0 = arith.constant 0 : i32
    return %arg0, %c0_i32 : i32, i32
  }
}

</mosaic_0001>

<llo_original>
// kernel: tpu_custom_call.1
$region0: #{tpu_custom_call.1}
  #allocation0 [shape = 'u32[]', space=smem, size = 0x4, offset = 0x4, fixed_abs, tag = 'smem constant byte address 0x4 - core index']
  #allocation1 [shape = 'u32[144,128]{1,0:T(1,128)}', space=vmem, size = 0x12000, scoped, tag = 'internal scratch']
  %s0 = inlined_call_operand.vmem [shape: s32[16,1], index: 0, kind: input, shape index: {}]
  %s1 = inlined_call_operand.hbm [shape: f32[128,256], index: 1, kind: input, shape index: {}]
  %s2 = inlined_call_operand.hbm [shape: f32[16,256], index: 2, kind: output, shape index: {}]
  %s3 = sld [smem:[#allocation0]]
  $region22: #{tpu_custom_call.1} parent=0
    _
  %s5 = ssub.s32 1, %s3
  %s6 = scalar_select 0, %s5, %s3
  $region1: #{tpu_custom_call.1} parent=0
    #allocation2 [shape = 'u8[131072]{0}', space=vmem, size = 0x20000, scoped, tag = 'input window, operand 1, single buffered']
    #allocation3 [shape = 's32[1]{0}', space=sflag, size = 0x4, scoped, tag = 'scoped memory for tpu_custom_call.1']
    #allocation4 [shape = 's32[1]{0}', space=sflag, size = 0x4, scoped, tag = 'scoped memory for tpu_custom_call.1']
    #allocation5 [shape = 'u8[16384]{0}', space=vmem, size = 0x4000, scoped, tag = 'output window, operand 0, single buffered']
    %7 = vsyncpa [#allocation3], 0
    %8 = vsyncpa [#allocation4], 0
    // Predicated region
    $region2: #{tpu_custom_call.1} parent=1 // pred_check
      _
    $region3: #{tpu_custom_call.1} parent=1 // pred_check_branch
      %10 = sbr.rel (0) target = $region5
    $region4: #{tpu_custom_call.1} parent=1 // pred_region
      _
    $region5: #{tpu_custom_call.1} parent=1 // pred_fallthru
      _
    // Predicated region
    $region6: #{tpu_custom_call.1} parent=1 // pred_check
      _
    $region7: #{tpu_custom_call.1} parent=1 // pred_check_branch
      %12 = sbr.rel (0) target = $region9
    $region8: #{tpu_custom_call.1} parent=1 // pred_region
      %s14 = ssub.s32 4096, 4096
      %15 = vsyncadd [#allocation3], %s14
      %s16 = sshll.u32 [#allocation2], 4
      %s17 = int_to_ptr.vmem [resolvable:$true] %s16
      %22 = dma.hbm_to_vmem [thread:$0]  %s1, 4096, %s17, [#allocation3], 256, 256, 16
    $region9: #{tpu_custom_call.1} parent=1 // pred_fallthru
      _
    // Predicated region
    $region10: #{tpu_custom_call.1} parent=1 // pred_check
      _
    $region11: #{tpu_custom_call.1} parent=1 // pred_check_branch
      %24 = sbr.rel (0) target = $region13
    $region12: #{tpu_custom_call.1} parent=1 // pred_region
      %25 = dma.done [#allocation3], 4096
    $region13: #{tpu_custom_call.1} parent=1 // pred_fallthru
      _
    %v26 = vld [vmem:[%s0] sm:$0xff]
    %v27 = vld [vmem:[%s0 + $0x8] sm:$0xff]
    %v28 = vlaneseq
    %v29 = vand.u32 %v28, 127
    %30 = vset.pattern.permute.xlu0 0
    %31 = vperm.xlu0 %30, %v26
    %v32 = vpop.permute.xlu0 %31
    %33 = vset.pattern.permute.xlu0 0
    %34 = vperm.xlu0 %33, %v27
    %v35 = vpop.permute.xlu0 %34
    %vm36 = vcmp.eq.s32.totalorder %v32, %v29
    %vm37 = vcmp.eq.s32.totalorder %v35, %v29
    %v38 = vsel %vm36, 1, 0
    %v39 = vsel %vm37, 1, 0
    %v40 = vcvt.s32.f32 %v38
    %v41 = vcvt.s32.f32 %v39
    %v42 = vld [vmem:[#allocation2] sm:$0xff]
    %v43 = vld [vmem:[#allocation2 + $0x8] sm:$0xff]
    %v44 = vld [vmem:[#allocation2 + $0x10] sm:$0xff]
    %v45 = vld [vmem:[#allocation2 + $0x18] sm:$0xff]
    %v46 = vld [vmem:[#allocation2 + $0x20] sm:$0xff]
    %v47 = vld [vmem:[#allocation2 + $0x28] sm:$0xff]
    %v48 = vld [vmem:[#allocation2 + $0x30] sm:$0xff]
    %v49 = vld [vmem:[#allocation2 + $0x38] sm:$0xff]
    %v50 = vld [vmem:[#allocation2 + $0x40] sm:$0xff]
    %v51 = vld [vmem:[#allocation2 + $0x48] sm:$0xff]
    %v52 = vld [vmem:[#allocation2 + $0x50] sm:$0xff]
    %v53 = vld [vmem:[#allocation2 + $0x58] sm:$0xff]
    %v54 = vld [vmem:[#allocation2 + $0x60] sm:$0xff]
    %v55 = vld [vmem:[#allocation2 + $0x68] sm:$0xff]
    %v56 = vld [vmem:[#allocation2 + $0x70] sm:$0xff]
    %v57 = vld [vmem:[#allocation2 + $0x78] sm:$0xff]
    %v58 = vld [vmem:[#allocation2 + $0x80] sm:$0xff]
    %v59 = vld [vmem:[#allocation2 + $0x88] sm:$0xff]
    %v60 = vld [vmem:[#allocation2 + $0x90] sm:$0xff]
    %v61 = vld [vmem:[#allocation2 + $0x98] sm:$0xff]
    %v62 = vld [vmem:[#allocation2 + $0xa0] sm:$0xff]
    %v63 = vld [vmem:[#allocation2 + $0xa8] sm:$0xff]
    %v64 = vld [vmem:[#allocation2 + $0xb0] sm:$0xff]
    %v65 = vld [vmem:[#allocation2 + $0xb8] sm:$0xff]
    %v66 = vld [vmem:[#allocation2 + $0xc0] sm:$0xff]
    %v67 = vld [vmem:[#allocation2 + $0xc8] sm:$0xff]
    %v68 = vld [vmem:[#allocation2 + $0xd0] sm:$0xff]
    %v69 = vld [vmem:[#allocation2 + $0xd8] sm:$0xff]
    %v70 = vld [vmem:[#allocation2 + $0xe0] sm:$0xff]
    %v71 = vld [vmem:[#allocation2 + $0xe8] sm:$0xff]
    %v72 = vld [vmem:[#allocation2 + $0xf0] sm:$0xff]
    %v73 = vld [vmem:[#allocation2 + $0xf8] sm:$0xff]
    %v74 = vand.u32 %v43, 4294901760
    %75 = vmatprep.subr.mxu0 %v74
    %v76 = vand.u32 %v42, 4294901760
    %77 = vmatpush1.msra.mxu0 %v76
    %v78 = vand.u32 %v45, 4294901760
    %79 = vmatprep.subr.mxu0 %v78
    %v80 = vand.u32 %v44, 4294901760
    %81 = vmatpush1.msra.mxu0 %v80
    %v82 = vand.u32 %v47, 4294901760
    %83 = vmatprep.subr.mxu0 %v82
    %v84 = vand.u32 %v46, 4294901760
    %85 = vmatpush1.msra.mxu0 %v84
    %v86 = vand.u32 %v49, 4294901760
    %87 = vmatprep.subr.mxu0 %v86
    %v88 = vand.u32 %v48, 4294901760
    %89 = vmatpush1.msra.mxu0 %v88
    %v90 = vand.u32 %v51, 4294901760
    %91 = vmatprep.subr.mxu0 %v90
    %v92 = vand.u32 %v50, 4294901760
    %93 = vmatpush1.msra.mxu0 %v92
    %v94 = vand.u32 %v53, 4294901760
    %95 = vmatprep.subr.mxu0 %v94
    %v96 = vand.u32 %v52, 4294901760
    %97 = vmatpush1.msra.mxu0 %v96
    %v98 = vand.u32 %v55, 4294901760
    %99 = vmatprep.subr.mxu0 %v98
    %v100 = vand.u32 %v54, 4294901760
    %101 = vmatpush1.msra.mxu0 %v100
    %v102 = vand.u32 %v57, 4294901760
    %103 = vmatprep.subr.mxu0 %v102
    %v104 = vand.u32 %v56, 4294901760
    %105 = vmatpush1.msra.mxu0 %v104
    %v106 = vand.u32 %v59, 4294901760
    %107 = vmatprep.subr.mxu0 %v106
    %v108 = vand.u32 %v58, 4294901760
    %109 = vmatpush1.msra.mxu0 %v108
    %v110 = vand.u32 %v61, 4294901760
    %111 = vmatprep.subr.mxu0 %v110
    %v112 = vand.u32 %v60, 4294901760
    %113 = vmatpush1.msra.mxu0 %v112
    %v114 = vand.u32 %v63, 4294901760
    %115 = vmatprep.subr.mxu0 %v114
    %v116 = vand.u32 %v62, 4294901760
    %117 = vmatpush1.msra.mxu0 %v116
    %v118 = vand.u32 %v65, 4294901760
    %119 = vmatprep.subr.mxu0 %v118
    %v120 = vand.u32 %v64, 4294901760
    %121 = vmatpush1.msra.mxu0 %v120
    %v122 = vand.u32 %v67, 4294901760
    %123 = vmatprep.subr.mxu0 %v122
    %v124 = vand.u32 %v66, 4294901760
    %125 = vmatpush1.msra.mxu0 %v124
    %v126 = vand.u32 %v69, 4294901760
    %127 = vmatprep.subr.mxu0 %v126
    %v128 = vand.u32 %v68, 4294901760
    %129 = vmatpush1.msra.mxu0 %v128
    %v130 = vand.u32 %v71, 4294901760
    %131 = vmatprep.subr.mxu0 %v130
    %v132 = vand.u32 %v70, 4294901760
    %133 = vmatpush1.msra.mxu0 %v132
    %v134 = vand.u32 %v73, 4294901760
    %135 = vmatprep.subr.mxu0 %v134
    %v136 = vand.u32 %v72, 4294901760
    %137 = vmatpush1.msra.mxu0 %v136
    %138 = vmatprep.subr.mxu0 0.0
    %139 = vmatpush1.msra.mxu0 0.0
    %140 = vmatprep.subr.mxu0 0.0
    %141 = vmatpush1.msra.mxu0 0.0
    %142 = vmatprep.subr.mxu0 0.0
    %143 = vmatpush1.msra.mxu0 0.0
    %144 = vmatprep.subr.mxu0 0.0
    %145 = vmatpush1.msra.mxu0 0.0
    %146 = vmatprep.subr.mxu0 0.0
    %147 = vmatpush1.msra.mxu0 0.0
    %148 = vmatprep.subr.mxu0 0.0
    %149 = vmatpush1.msra.mxu0 0.0
    %150 = vmatprep.subr.mxu0 0.0
    %151 = vmatpush1.msra.mxu0 0.0
    %152 = vmatprep.subr.mxu0 0.0
    %153 = vmatpush1.msra.mxu0 0.0
    %154 = vmatprep.subr.mxu0 0.0
    %155 = vmatpush1.msra.mxu0 0.0
    %156 = vmatprep.subr.mxu0 0.0
    %157 = vmatpush1.msra.mxu0 0.0
    %158 = vmatprep.subr.mxu0 0.0
    %159 = vmatpush1.msra.mxu0 0.0
    %160 = vmatprep.subr.mxu0 0.0
    %161 = vmatpush1.msra.mxu0 0.0
    %162 = vmatprep.subr.mxu0 0.0
    %163 = vmatpush1.msra.mxu0 0.0
    %164 = vmatprep.subr.mxu0 0.0
    %165 = vmatpush1.msra.mxu0 0.0
    %166 = vmatprep.subr.mxu0 0.0
    %167 = vmatpush1.msra.mxu0 0.0
    %168 = vmatprep.subr.mxu0 0.0
    %169 = vmatpush1.msra.mxu0 0.0
    %170 = vmatprep.mubr.f32.mxu0 0.0
    %v171 = vand.u32 %v40, 4294901760
    %v172 = vsub.f32 %v40, %v171
    %v173 = vand.u32 %v172, 4294901760
    %v174 = vsub.f32 %v172, %v173
    %v175 = vand.u32 %v174, 4294901760
    %176 = vmatmul.mubr.f32.gmra.mrb[0].mxu0 %v175
    %v177 = vpop.f32.mrb[0].mxu0
    %v178 = vadd.f32 0.0, %v177
    %v179 = vpop.f32.mrb[0].mxu0
    %v180 = vadd.f32 0.0, %v179
    %181 = vmatprep.mubr.f32.mxu0 0.0
    %v182 = vand.u32 %v41, 4294901760
    %v183 = vsub.f32 %v41, %v182
    %v184 = vand.u32 %v183, 4294901760
    %v185 = vsub.f32 %v183, %v184
    %v186 = vand.u32 %v185, 4294901760
    %187 = vmatmul.mubr.f32.gmra.mrb[0].mxu0 %v186
    %v188 = vpop.f32.mrb[0].mxu0
    %v189 = vadd.f32 0.0, %v188
    %v190 = vpop.f32.mrb[0].mxu0
    %v191 = vadd.f32 0.0, %v190
    %192 = vdwg.mxu0
    %v193 = vand.u32 %v43, 4294901760
    %v194 = vsub.f32 %v43, %v193
    %v195 = vand.u32 %v194, 4294901760
    %v196 = vsub.f32 %v194, %v195
    %v197 = vand.u32 %v196, 4294901760
    %198 = vmatprep.subr.mxu0 %v197
    %v199 = vand.u32 %v42, 4294901760
    %v200 = vsub.f32 %v42, %v199
    %v201 = vand.u32 %v200, 4294901760
    %v202 = vsub.f32 %v200, %v201
    %v203 = vand.u32 %v202, 4294901760
    %204 = vmatpush1.msra.mxu0 %v203
    %v205 = vand.u32 %v45, 4294901760
    %v206 = vsub.f32 %v45, %v205
    %v207 = vand.u32 %v206, 4294901760
    %v208 = vsub.f32 %v206, %v207
    %v209 = vand.u32 %v208, 4294901760
    %210 = vmatprep.subr.mxu0 %v209
    %v211 = vand.u32 %v44, 4294901760
    %v212 = vsub.f32 %v44, %v211
    %v213 = vand.u32 %v212, 4294901760
    %v214 = vsub.f32 %v212, %v213
    %v215 = vand.u32 %v214, 4294901760
    %216 = vmatpush1.msra.mxu0 %v215
    %v217 = vand.u32 %v47, 4294901760
    %v218 = vsub.f32 %v47, %v217
    %v219 = vand.u32 %v218, 4294901760
    %v220 = vsub.f32 %v218, %v219
    %v221 = vand.u32 %v220, 4294901760
    %222 = vmatprep.subr.mxu0 %v221
    %v223 = vand.u32 %v46, 4294901760
    %v224 = vsub.f32 %v46, %v223
    %v225 = vand.u32 %v224, 4294901760
    %v226 = vsub.f32 %v224, %v225
    %v227 = vand.u32 %v226, 4294901760
    %228 = vmatpush1.msra.mxu0 %v227
    %v229 = vand.u32 %v49, 4294901760
    %v230 = vsub.f32 %v49, %v229
    %v231 = vand.u32 %v230, 4294901760
    %v232 = vsub.f32 %v230, %v231
    %v233 = vand.u32 %v232, 4294901760
    %234 = vmatprep.subr.mxu0 %v233
    %v235 = vand.u32 %v48, 4294901760
    %v236 = vsub.f32 %v48, %v235
    %v237 = vand.u32 %v236, 4294901760
    %v238 = vsub.f32 %v236, %v237
    %v239 = vand.u32 %v238, 4294901760
    %240 = vmatpush1.msra.mxu0 %v239
    %v241 = vand.u32 %v51, 4294901760
    %v242 = vsub.f32 %v51, %v241
    %v243 = vand.u32 %v242, 4294901760
    %v244 = vsub.f32 %v242, %v243
    %v245 = vand.u32 %v244, 4294901760
    %246 = vmatprep.subr.mxu0 %v245
    %v247 = vand.u32 %v50, 4294901760
    %v248 = vsub.f32 %v50, %v247
    %v249 = vand.u32 %v248, 4294901760
    %v250 = vsub.f32 %v248, %v249
    %v251 = vand.u32 %v250, 4294901760
    %252 = vmatpush1.msra.mxu0 %v251
    %v253 = vand.u32 %v53, 4294901760
    %v254 = vsub.f32 %v53, %v253
    %v255 = vand.u32 %v254, 4294901760
    %v256 = vsub.f32 %v254, %v255
    %v257 = vand.u32 %v256, 4294901760
    %258 = vmatprep.subr.mxu0 %v257
    %v259 = vand.u32 %v52, 4294901760
    %v260 = vsub.f32 %v52, %v259
    %v261 = vand.u32 %v260, 4294901760
    %v262 = vsub.f32 %v260, %v261
    %v263 = vand.u32 %v262, 4294901760
    %264 = vmatpush1.msra.mxu0 %v263
    %v265 = vand.u32 %v55, 4294901760
    %v266 = vsub.f32 %v55, %v265
    %v267 = vand.u32 %v266, 4294901760
    %v268 = vsub.f32 %v266, %v267
    %v269 = vand.u32 %v268, 4294901760
    %270 = vmatprep.subr.mxu0 %v269
    %v271 = vand.u32 %v54, 4294901760
    %v272 = vsub.f32 %v54, %v271
    %v273 = vand.u32 %v272, 4294901760
    %v274 = vsub.f32 %v272, %v273
    %v275 = vand.u32 %v274, 4294901760
    %276 = vmatpush1.msra.mxu0 %v275
    %v277 = vand.u32 %v57, 4294901760
    %v278 = vsub.f32 %v57, %v277
    %v279 = vand.u32 %v278, 4294901760
    %v280 = vsub.f32 %v278, %v279
    %v281 = vand.u32 %v280, 4294901760
    %282 = vmatprep.subr.mxu0 %v281
    %v283 = vand.u32 %v56, 4294901760
    %v284 = vsub.f32 %v56, %v283
    %v285 = vand.u32 %v284, 4294901760
    %v286 = vsub.f32 %v284, %v285
    %v287 = vand.u32 %v286, 4294901760
    %288 = vmatpush1.msra.mxu0 %v287
    %v289 = vand.u32 %v59, 4294901760
    %v290 = vsub.f32 %v59, %v289
    %v291 = vand.u32 %v290, 4294901760
    %v292 = vsub.f32 %v290, %v291
    %v293 = vand.u32 %v292, 4294901760
    %294 = vmatprep.subr.mxu0 %v293
    %v295 = vand.u32 %v58, 4294901760
    %v296 = vsub.f32 %v58, %v295
    %v297 = vand.u32 %v296, 4294901760
    %v298 = vsub.f32 %v296, %v297
    %v299 = vand.u32 %v298, 4294901760
    %300 = vmatpush1.msra.mxu0 %v299
    %v301 = vand.u32 %v61, 4294901760
    %v302 = vsub.f32 %v61, %v301
    %v303 = vand.u32 %v302, 4294901760
    %v304 = vsub.f32 %v302, %v303
    %v305 = vand.u32 %v304, 4294901760
    %306 = vmatprep.subr.mxu0 %v305
    %v307 = vand.u32 %v60, 4294901760
    %v308 = vsub.f32 %v60, %v307
    %v309 = vand.u32 %v308, 4294901760
    %v310 = vsub.f32 %v308, %v309
    %v311 = vand.u32 %v310, 4294901760
    %312 = vmatpush1.msra.mxu0 %v311
    %v313 = vand.u32 %v63, 4294901760
    %v314 = vsub.f32 %v63, %v313
    %v315 = vand.u32 %v314, 4294901760
    %v316 = vsub.f32 %v314, %v315
    %v317 = vand.u32 %v316, 4294901760
    %318 = vmatprep.subr.mxu0 %v317
    %v319 = vand.u32 %v62, 4294901760
    %v320 = vsub.f32 %v62, %v319
    %v321 = vand.u32 %v320, 4294901760
    %v322 = vsub.f32 %v320, %v321
    %v323 = vand.u32 %v322, 4294901760
    %324 = vmatpush1.msra.mxu0 %v323
    %v325 = vand.u32 %v65, 4294901760
    %v326 = vsub.f32 %v65, %v325
    %v327 = vand.u32 %v326, 4294901760
    %v328 = vsub.f32 %v326, %v327
    %v329 = vand.u32 %v328, 4294901760
    %330 = vmatprep.subr.mxu0 %v329
    %v331 = vand.u32 %v64, 4294901760
    %v332 = vsub.f32 %v64, %v331
    %v333 = vand.u32 %v332, 4294901760
    %v334 = vsub.f32 %v332, %v333
    %v335 = vand.u32 %v334, 4294901760
    %336 = vmatpush1.msra.mxu0 %v335
    %v337 = vand.u32 %v67, 4294901760
    %v338 = vsub.f32 %v67, %v337
    %v339 = vand.u32 %v338, 4294901760
    %v340 = vsub.f32 %v338, %v339
    %v341 = vand.u32 %v340, 4294901760
    %342 = vmatprep.subr.mxu0 %v341
    %v343 = vand.u32 %v66, 4294901760
    %v344 = vsub.f32 %v66, %v343
    %v345 = vand.u32 %v344, 4294901760
    %v346 = vsub.f32 %v344, %v345
    %v347 = vand.u32 %v346, 4294901760
    %348 = vmatpush1.msra.mxu0 %v347
    %v349 = vand.u32 %v69, 4294901760
    %v350 = vsub.f32 %v69, %v349
    %v351 = vand.u32 %v350, 4294901760
    %v352 = vsub.f32 %v350, %v351
    %v353 = vand.u32 %v352, 4294901760
    %354 = vmatprep.subr.mxu0 %v353
    %v355 = vand.u32 %v68, 4294901760
    %v356 = vsub.f32 %v68, %v355
    %v357 = vand.u32 %v356, 4294901760
    %v358 = vsub.f32 %v356, %v357
    %v359 = vand.u32 %v358, 4294901760
    %360 = vmatpush1.msra.mxu0 %v359
    %v361 = vand.u32 %v71, 4294901760
    %v362 = vsub.f32 %v71, %v361
    %v363 = vand.u32 %v362, 4294901760
    %v364 = vsub.f32 %v362, %v363
    %v365 = vand.u32 %v364, 4294901760
    %366 = vmatprep.subr.mxu0 %v365
    %v367 = vand.u32 %v70, 4294901760
    %v368 = vsub.f32 %v70, %v367
    %v369 = vand.u32 %v368, 4294901760
    %v370 = vsub.f32 %v368, %v369
    %v371 = vand.u32 %v370, 4294901760
    %372 = vmatpush1.msra.mxu0 %v371
    %v373 = vand.u32 %v73, 4294901760
    %v374 = vsub.f32 %v73, %v373
    %v375 = vand.u32 %v374, 4294901760
    %v376 = vsub.f32 %v374, %v375
    %v377 = vand.u32 %v376, 4294901760
    %378 = vmatprep.subr.mxu0 %v377
    %v379 = vand.u32 %v72, 4294901760
    %v380 = vsub.f32 %v72, %v379
    %v381 = vand.u32 %v380, 4294901760
    %v382 = vsub.f32 %v380, %v381
    %v383 = vand.u32 %v382, 4294901760
    %384 = vmatpush1.msra.mxu0 %v383
    %385 = vmatprep.subr.mxu0 0.0
    %386 = vmatpush1.msra.mxu0 0.0
    %387 = vmatprep.subr.mxu0 0.0
    %388 = vmatpush1.msra.mxu0 0.0
    %389 = vmatprep.subr.mxu0 0.0
    %390 = vmatpush1.msra.mxu0 0.0
    %391 = vmatprep.subr.mxu0 0.0
    %392 = vmatpush1.msra.mxu0 0.0
    %393 = vmatprep.subr.mxu0 0.0
    %394 = vmatpush1.msra.mxu0 0.0
    %395 = vmatprep.subr.mxu0 0.0
    %396 = vmatpush1.msra.mxu0 0.0
    %397 = vmatprep.subr.mxu0 0.0
    %398 = vmatpush1.msra.mxu0 0.0
    %399 = vmatprep.subr.mxu0 0.0
    %400 = vmatpush1.msra.mxu0 0.0
    %401 = vmatprep.subr.mxu0 0.0
    %402 = vmatpush1.msra.mxu0 0.0
    %403 = vmatprep.subr.mxu0 0.0
    %404 = vmatpush1.msra.mxu0 0.0
    %405 = vmatprep.subr.mxu0 0.0
    %406 = vmatpush1.msra.mxu0 0.0
    %407 = vmatprep.subr.mxu0 0.0
    %408 = vmatpush1.msra.mxu0 0.0
    %409 = vmatprep.subr.mxu0 0.0
    %410 = vmatpush1.msra.mxu0 0.0
    %411 = vmatprep.subr.mxu0 0.0
    %412 = vmatpush1.msra.mxu0 0.0
    %413 = vmatprep.subr.mxu0 0.0
    %414 = vmatpush1.msra.mxu0 0.0
    %415 = vmatprep.subr.mxu0 0.0
    %416 = vmatpush1.msra.mxu0 0.0
    %417 = vmatprep.mubr.f32.mxu0 0.0
    %v418 = vand.u32 %v40, 4294901760
    %419 = vmatmul.mubr.f32.gmra.mrb[0].mxu0 %v418
    %v420 = vpop.f32.mrb[0].mxu0
    %v421 = vadd.f32 %v178, %v420
    %v422 = vpop.f32.mrb[0].mxu0
    %v423 = vadd.f32 %v180, %v422
    %424 = vmatprep.mubr.f32.mxu0 0.0
    %v425 = vand.u32 %v41, 4294901760
    %426 = vmatmul.mubr.f32.gmra.mrb[0].mxu0 %v425
    %v427 = vpop.f32.mrb[0].mxu0
    %v428 = vadd.f32 %v189, %v427
    %v429 = vpop.f32.mrb[0].mxu0
    %v430 = vadd.f32 %v191, %v429
    %431 = vdwg.mxu0
    %v432 = vand.u32 %v43, 4294901760
    %v433 = vsub.f32 %v43, %v432
    %434 = vmatprep.subr.mxu0 %v433
    %v435 = vand.u32 %v42, 4294901760
    %v436 = vsub.f32 %v42, %v435
    %437 = vmatpush1.msra.mxu0 %v436
    %v438 = vand.u32 %v45, 4294901760
    %v439 = vsub.f32 %v45, %v438
    %440 = vmatprep.subr.mxu0 %v439
    %v441 = vand.u32 %v44, 4294901760
    %v442 = vsub.f32 %v44, %v441
    %443 = vmatpush1.msra.mxu0 %v442
    %v444 = vand.u32 %v47, 4294901760
    %v445 = vsub.f32 %v47, %v444
    %446 = vmatprep.subr.mxu0 %v445
    %v447 = vand.u32 %v46, 4294901760
    %v448 = vsub.f32 %v46, %v447
    %449 = vmatpush1.msra.mxu0 %v448
    %v450 = vand.u32 %v49, 4294901760
    %v451 = vsub.f32 %v49, %v450
    %452 = vmatprep.subr.mxu0 %v451
    %v453 = vand.u32 %v48, 4294901760
    %v454 = vsub.f32 %v48, %v453
    %455 = vmatpush1.msra.mxu0 %v454
    %v456 = vand.u32 %v51, 4294901760
    %v457 = vsub.f32 %v51, %v456
    %458 = vmatprep.subr.mxu0 %v457
    %v459 = vand.u32 %v50, 4294901760
    %v460 = vsub.f32 %v50, %v459
    %461 = vmatpush1.msra.mxu0 %v460
    %v462 = vand.u32 %v53, 4294901760
    %v463 = vsub.f32 %v53, %v462
    %464 = vmatprep.subr.mxu0 %v463
    %v465 = vand.u32 %v52, 4294901760
    %v466 = vsub.f32 %v52, %v465
    %467 = vmatpush1.msra.mxu0 %v466
    %v468 = vand.u32 %v55, 4294901760
    %v469 = vsub.f32 %v55, %v468
    %470 = vmatprep.subr.mxu0 %v469
    %v471 = vand.u32 %v54, 4294901760
    %v472 = vsub.f32 %v54, %v471
    %473 = vmatpush1.msra.mxu0 %v472
    %v474 = vand.u32 %v57, 4294901760
    %v475 = vsub.f32 %v57, %v474
    %476 = vmatprep.subr.mxu0 %v475
    %v477 = vand.u32 %v56, 4294901760
    %v478 = vsub.f32 %v56, %v477
    %479 = vmatpush1.msra.mxu0 %v478
    %v480 = vand.u32 %v59, 4294901760
    %v481 = vsub.f32 %v59, %v480
    %482 = vmatprep.subr.mxu0 %v481
    %v483 = vand.u32 %v58, 4294901760
    %v484 = vsub.f32 %v58, %v483
    %485 = vmatpush1.msra.mxu0 %v484
    %v486 = vand.u32 %v61, 4294901760
    %v487 = vsub.f32 %v61, %v486
    %488 = vmatprep.subr.mxu0 %v487
    %v489 = vand.u32 %v60, 4294901760
    %v490 = vsub.f32 %v60, %v489
    %491 = vmatpush1.msra.mxu0 %v490
    %v492 = vand.u32 %v63, 4294901760
    %v493 = vsub.f32 %v63, %v492
    %494 = vmatprep.subr.mxu0 %v493
    %v495 = vand.u32 %v62, 4294901760
    %v496 = vsub.f32 %v62, %v495
    %497 = vmatpush1.msra.mxu0 %v496
    %v498 = vand.u32 %v65, 4294901760
    %v499 = vsub.f32 %v65, %v498
    %500 = vmatprep.subr.mxu0 %v499
    %v501 = vand.u32 %v64, 4294901760
    %v502 = vsub.f32 %v64, %v501
    %503 = vmatpush1.msra.mxu0 %v502
    %v504 = vand.u32 %v67, 4294901760
    %v505 = vsub.f32 %v67, %v504
    %506 = vmatprep.subr.mxu0 %v505
    %v507 = vand.u32 %v66, 4294901760
    %v508 = vsub.f32 %v66, %v507
    %509 = vmatpush1.msra.mxu0 %v508
    %v510 = vand.u32 %v69, 4294901760
    %v511 = vsub.f32 %v69, %v510
    %512 = vmatprep.subr.mxu0 %v511
    %v513 = vand.u32 %v68, 4294901760
    %v514 = vsub.f32 %v68, %v513
    %515 = vmatpush1.msra.mxu0 %v514
    %v516 = vand.u32 %v71, 4294901760
    %v517 = vsub.f32 %v71, %v516
    %518 = vmatprep.subr.mxu0 %v517
    %v519 = vand.u32 %v70, 4294901760
    %v520 = vsub.f32 %v70, %v519
    %521 = vmatpush1.msra.mxu0 %v520
    %v522 = vand.u32 %v73, 4294901760
    %v523 = vsub.f32 %v73, %v522
    %524 = vmatprep.subr.mxu0 %v523
    %v525 = vand.u32 %v72, 4294901760
    %v526 = vsub.f32 %v72, %v525
    %527 = vmatpush1.msra.mxu0 %v526
    %528 = vmatprep.subr.mxu0 0.0
    %529 = vmatpush1.msra.mxu0 0.0
    %530 = vmatprep.subr.mxu0 0.0
    %531 = vmatpush1.msra.mxu0 0.0
    %532 = vmatprep.subr.mxu0 0.0
    %533 = vmatpush1.msra.mxu0 0.0
    %534 = vmatprep.subr.mxu0 0.0
    %535 = vmatpush1.msra.mxu0 0.0
    %536 = vmatprep.subr.mxu0 0.0
    %537 = vmatpush1.msra.mxu0 0.0
    %538 = vmatprep.subr.mxu0 0.0
    %539 = vmatpush1.msra.mxu0 0.0
    %540 = vmatprep.subr.mxu0 0.0
    %541 = vmatpush1.msra.mxu0 0.0
    %542 = vmatprep.subr.mxu0 0.0
    %543 = vmatpush1.msra.mxu0 0.0
    %544 = vmatprep.subr.mxu0 0.0
    %545 = vmatpush1.msra.mxu0 0.0
    %546 = vmatprep.subr.mxu0 0.0
    %547 = vmatpush1.msra.mxu0 0.0
    %548 = vmatprep.subr.mxu0 0.0
    %549 = vmatpush1.msra.mxu0 0.0
    %550 = vmatprep.subr.mxu0 0.0
    %551 = vmatpush1.msra.mxu0 0.0
    %552 = vmatprep.subr.mxu0 0.0
    %553 = vmatpush1.msra.mxu0 0.0
    %554 = vmatprep.subr.mxu0 0.0
    %555 = vmatpush1.msra.mxu0 0.0
    %556 = vmatprep.subr.mxu0 0.0
    %557 = vmatpush1.msra.mxu0 0.0
    %558 = vmatprep.subr.mxu0 0.0
    %559 = vmatpush1.msra.mxu0 0.0
    %560 = vmatprep.mubr.f32.mxu0 0.0
    %v561 = vand.u32 %v40, 4294901760
    %v562 = vsub.f32 %v40, %v561
    %563 = vmatmul.mubr.f32.gmra.mrb[0].mxu0 %v562
    %v564 = vpop.f32.mrb[0].mxu0
    %v565 = vadd.f32 %v421, %v564
    %v566 = vpop.f32.mrb[0].mxu0
    %v567 = vadd.f32 %v423, %v566
    %568 = vmatprep.mubr.f32.mxu0 0.0
    %v569 = vand.u32 %v41, 4294901760
    %v570 = vsub.f32 %v41, %v569
    %571 = vmatmul.mubr.f32.gmra.mrb[0].mxu0 %v570
    %v572 = vpop.f32.mrb[0].mxu0
    %v573 = vadd.f32 %v428, %v572
    %v574 = vpop.f32.mrb[0].mxu0
    %v575 = vadd.f32 %v430, %v574
    %576 = vdwg.mxu0
    %v577 = vand.u32 %v43, 4294901760
    %578 = vmatprep.subr.mxu0 %v577
    %v579 = vand.u32 %v42, 4294901760
    %580 = vmatpush1.msra.mxu0 %v579
    %v581 = vand.u32 %v45, 4294901760
    %582 = vmatprep.subr.mxu0 %v581
    %v583 = vand.u32 %v44, 4294901760
    %584 = vmatpush1.msra.mxu0 %v583
    %v585 = vand.u32 %v47, 4294901760
    %586 = vmatprep.subr.mxu0 %v585
    %v587 = vand.u32 %v46, 4294901760
    %588 = vmatpush1.msra.mxu0 %v587
    %v589 = vand.u32 %v49, 4294901760
    %590 = vmatprep.subr.mxu0 %v589
    %v591 = vand.u32 %v48, 4294901760
    %592 = vmatpush1.msra.mxu0 %v591
    %v593 = vand.u32 %v51, 4294901760
    %594 = vmatprep.subr.mxu0 %v593
    %v595 = vand.u32 %v50, 4294901760
    %596 = vmatpush1.msra.mxu0 %v595
    %v597 = vand.u32 %v53, 4294901760
    %598 = vmatprep.subr.mxu0 %v597
    %v599 = vand.u32 %v52, 4294901760
    %600 = vmatpush1.msra.mxu0 %v599
    %v601 = vand.u32 %v55, 4294901760
    %602 = vmatprep.subr.mxu0 %v601
    %v603 = vand.u32 %v54, 4294901760
    %604 = vmatpush1.msra.mxu0 %v603
    %v605 = vand.u32 %v57, 4294901760
    %606 = vmatprep.subr.mxu0 %v605
    %v607 = vand.u32 %v56, 4294901760
    %608 = vmatpush1.msra.mxu0 %v607
    %v609 = vand.u32 %v59, 4294901760
    %610 = vmatprep.subr.mxu0 %v609
    %v611 = vand.u32 %v58, 4294901760
    %612 = vmatpush1.msra.mxu0 %v611
    %v613 = vand.u32 %v61, 4294901760
    %614 = vmatprep.subr.mxu0 %v613
    %v615 = vand.u32 %v60, 4294901760
    %616 = vmatpush1.msra.mxu0 %v615
    %v617 = vand.u32 %v63, 4294901760
    %618 = vmatprep.subr.mxu0 %v617
    %v619 = vand.u32 %v62, 4294901760
    %620 = vmatpush1.msra.mxu0 %v619
    %v621 = vand.u32 %v65, 4294901760
    %622 = vmatprep.subr.mxu0 %v621
    %v623 = vand.u32 %v64, 4294901760
    %624 = vmatpush1.msra.mxu0 %v623
    %v625 = vand.u32 %v67, 4294901760
    %626 = vmatprep.subr.mxu0 %v625
    %v627 = vand.u32 %v66, 4294901760
    %628 = vmatpush1.msra.mxu0 %v627
    %v629 = vand.u32 %v69, 4294901760
    %630 = vmatprep.subr.mxu0 %v629
    %v631 = vand.u32 %v68, 4294901760
    %632 = vmatpush1.msra.mxu0 %v631
    %v633 = vand.u32 %v71, 4294901760
    %634 = vmatprep.subr.mxu0 %v633
    %v635 = vand.u32 %v70, 4294901760
    %636 = vmatpush1.msra.mxu0 %v635
    %v637 = vand.u32 %v73, 4294901760
    %638 = vmatprep.subr.mxu0 %v637
    %v639 = vand.u32 %v72, 4294901760
    %640 = vmatpush1.msra.mxu0 %v639
    %641 = vmatprep.subr.mxu0 0.0
    %642 = vmatpush1.msra.mxu0 0.0
    %643 = vmatprep.subr.mxu0 0.0
    %644 = vmatpush1.msra.mxu0 0.0
    %645 = vmatprep.subr.mxu0 0.0
    %646 = vmatpush1.msra.mxu0 0.0
    %647 = vmatprep.subr.mxu0 0.0
    %648 = vmatpush1.msra.mxu0 0.0
    %649 = vmatprep.subr.mxu0 0.0
    %650 = vmatpush1.msra.mxu0 0.0
    %651 = vmatprep.subr.mxu0 0.0
    %652 = vmatpush1.msra.mxu0 0.0
    %653 = vmatprep.subr.mxu0 0.0
    %654 = vmatpush1.msra.mxu0 0.0
    %655 = vmatprep.subr.mxu0 0.0
    %656 = vmatpush1.msra.mxu0 0.0
    %657 = vmatprep.subr.mxu0 0.0
    %658 = vmatpush1.msra.mxu0 0.0
    %659 = vmatprep.subr.mxu0 0.0
    %660 = vmatpush1.msra.mxu0 0.0
    %661 = vmatprep.subr.mxu0 0.0
    %662 = vmatpush1.msra.mxu0 0.0
    %663 = vmatprep.subr.mxu0 0.0
    %664 = vmatpush1.msra.mxu0 0.0
    %665 = vmatprep.subr.mxu0 0.0
    %666 = vmatpush1.msra.mxu0 0.0
    %667 = vmatprep.subr.mxu0 0.0
    %668 = vmatpush1.msra.mxu0 0.0
    %669 = vmatprep.subr.mxu0 0.0
    %670 = vmatpush1.msra.mxu0 0.0
    %671 = vmatprep.subr.mxu0 0.0
    %672 = vmatpush1.msra.mxu0 0.0
    %673 = vmatprep.mubr.f32.mxu0 0.0
    %v674 = vand.u32 %v40, 4294901760
    %v675 = vsub.f32 %v40, %v674
    %v676 = vand.u32 %v675, 4294901760
    %677 = vmatmul.mubr.f32.gmra.mrb[0].mxu0 %v676
    %v678 = vpop.f32.mrb[0].mxu0
    %v679 = vadd.f32 %v565, %v678
    %v680 = vpop.f32.mrb[0].mxu0
    %v681 = vadd.f32 %v567, %v680
    %682 = vmatprep.mubr.f32.mxu0 0.0
    %v683 = vand.u32 %v41, 4294901760
    %v684 = vsub.f32 %v41, %v683
    %v685 = vand.u32 %v684, 4294901760
    %686 = vmatmul.mubr.f32.gmra.mrb[0].mxu0 %v685
    %v687 = vpop.f32.mrb[0].mxu0
    %v688 = vadd.f32 %v573, %v687
    %v689 = vpop.f32.mrb[0].mxu0
    %v690 = vadd.f32 %v575, %v689
    %691 = vdwg.mxu0
    %v692 = vand.u32 %v43, 4294901760
    %v693 = vsub.f32 %v43, %v692
    %v694 = vand.u32 %v693, 4294901760
    %695 = vmatprep.subr.mxu0 %v694
    %v696 = vand.u32 %v42, 4294901760
    %v697 = vsub.f32 %v42, %v696
    %v698 = vand.u32 %v697, 4294901760
    %699 = vmatpush1.msra.mxu0 %v698
    %v700 = vand.u32 %v45, 4294901760
    %v701 = vsub.f32 %v45, %v700
    %v702 = vand.u32 %v701, 4294901760
    %703 = vmatprep.subr.mxu0 %v702
    %v704 = vand.u32 %v44, 4294901760
    %v705 = vsub.f32 %v44, %v704
    %v706 = vand.u32 %v705, 4294901760
    %707 = vmatpush1.msra.mxu0 %v706
    %v708 = vand.u32 %v47, 4294901760
    %v709 = vsub.f32 %v47, %v708
    %v710 = vand.u32 %v709, 4294901760
    %711 = vmatprep.subr.mxu0 %v710
    %v712 = vand.u32 %v46, 4294901760
    %v713 = vsub.f32 %v46, %v712
    %v714 = vand.u32 %v713, 4294901760
    %715 = vmatpush1.msra.mxu0 %v714
    %v716 = vand.u32 %v49, 4294901760
    %v717 = vsub.f32 %v49, %v716
    %v718 = vand.u32 %v717, 4294901760
    %719 = vmatprep.subr.mxu0 %v718
    %v720 = vand.u32 %v48, 4294901760
    %v721 = vsub.f32 %v48, %v720
    %v722 = vand.u32 %v721, 4294901760
    %723 = vmatpush1.msra.mxu0 %v722
    %v724 = vand.u32 %v51, 4294901760
    %v725 = vsub.f32 %v51, %v724
    %v726 = vand.u32 %v725, 4294901760
    %727 = vmatprep.subr.mxu0 %v726
    %v728 = vand.u32 %v50, 4294901760
    %v729 = vsub.f32 %v50, %v728
    %v730 = vand.u32 %v729, 4294901760
    %731 = vmatpush1.msra.mxu0 %v730
    %v732 = vand.u32 %v53, 4294901760
    %v733 = vsub.f32 %v53, %v732
    %v734 = vand.u32 %v733, 4294901760
    %735 = vmatprep.subr.mxu0 %v734
    %v736 = vand.u32 %v52, 4294901760
    %v737 = vsub.f32 %v52, %v736
    %v738 = vand.u32 %v737, 4294901760
    %739 = vmatpush1.msra.mxu0 %v738
    %v740 = vand.u32 %v55, 4294901760
    %v741 = vsub.f32 %v55, %v740
    %v742 = vand.u32 %v741, 4294901760
    %743 = vmatprep.subr.mxu0 %v742
    %v744 = vand.u32 %v54, 4294901760
    %v745 = vsub.f32 %v54, %v744
    %v746 = vand.u32 %v745, 4294901760
    %747 = vmatpush1.msra.mxu0 %v746
    %v748 = vand.u32 %v57, 4294901760
    %v749 = vsub.f32 %v57, %v748
    %v750 = vand.u32 %v749, 4294901760
    %751 = vmatprep.subr.mxu0 %v750
    %v752 = vand.u32 %v56, 4294901760
    %v753 = vsub.f32 %v56, %v752
    %v754 = vand.u32 %v753, 4294901760
    %755 = vmatpush1.msra.mxu0 %v754
    %v756 = vand.u32 %v59, 4294901760
    %v757 = vsub.f32 %v59, %v756
    %v758 = vand.u32 %v757, 4294901760
    %759 = vmatprep.subr.mxu0 %v758
    %v760 = vand.u32 %v58, 4294901760
    %v761 = vsub.f32 %v58, %v760
    %v762 = vand.u32 %v761, 4294901760
    %763 = vmatpush1.msra.mxu0 %v762
    %v764 = vand.u32 %v61, 4294901760
    %v765 = vsub.f32 %v61, %v764
    %v766 = vand.u32 %v765, 4294901760
    %767 = vmatprep.subr.mxu0 %v766
    %v768 = vand.u32 %v60, 4294901760
    %v769 = vsub.f32 %v60, %v768
    %v770 = vand.u32 %v769, 4294901760
    %771 = vmatpush1.msra.mxu0 %v770
    %v772 = vand.u32 %v63, 4294901760
    %v773 = vsub.f32 %v63, %v772
    %v774 = vand.u32 %v773, 4294901760
    %775 = vmatprep.subr.mxu0 %v774
    %v776 = vand.u32 %v62, 4294901760
    %v777 = vsub.f32 %v62, %v776
    %v778 = vand.u32 %v777, 4294901760
    %779 = vmatpush1.msra.mxu0 %v778
    %v780 = vand.u32 %v65, 4294901760
    %v781 = vsub.f32 %v65, %v780
    %v782 = vand.u32 %v781, 4294901760
    %783 = vmatprep.subr.mxu0 %v782
    %v784 = vand.u32 %v64, 4294901760
    %v785 = vsub.f32 %v64, %v784
    %v786 = vand.u32 %v785, 4294901760
    %787 = vmatpush1.msra.mxu0 %v786
    %v788 = vand.u32 %v67, 4294901760
    %v789 = vsub.f32 %v67, %v788
    %v790 = vand.u32 %v789, 4294901760
    %791 = vmatprep.subr.mxu0 %v790
    %v792 = vand.u32 %v66, 4294901760
    %v793 = vsub.f32 %v66, %v792
    %v794 = vand.u32 %v793, 4294901760
    %795 = vmatpush1.msra.mxu0 %v794
    %v796 = vand.u32 %v69, 4294901760
    %v797 = vsub.f32 %v69, %v796
    %v798 = vand.u32 %v797, 4294901760
    %799 = vmatprep.subr.mxu0 %v798
    %v800 = vand.u32 %v68, 4294901760
    %v801 = vsub.f32 %v68, %v800
    %v802 = vand.u32 %v801, 4294901760
    %803 = vmatpush1.msra.mxu0 %v802
    %v804 = vand.u32 %v71, 4294901760
    %v805 = vsub.f32 %v71, %v804
    %v806 = vand.u32 %v805, 4294901760
    %807 = vmatprep.subr.mxu0 %v806
    %v808 = vand.u32 %v70, 4294901760
    %v809 = vsub.f32 %v70, %v808
    %v810 = vand.u32 %v809, 4294901760
    %811 = vmatpush1.msra.mxu0 %v810
    %v812 = vand.u32 %v73, 4294901760
    %v813 = vsub.f32 %v73, %v812
    %v814 = vand.u32 %v813, 4294901760
    %815 = vmatprep.subr.mxu0 %v814
    %v816 = vand.u32 %v72, 4294901760
    %v817 = vsub.f32 %v72, %v816
    %v818 = vand.u32 %v817, 4294901760
    %819 = vmatpush1.msra.mxu0 %v818
    %820 = vmatprep.subr.mxu0 0.0
    %821 = vmatpush1.msra.mxu0 0.0
    %822 = vmatprep.subr.mxu0 0.0
    %823 = vmatpush1.msra.mxu0 0.0
    %824 = vmatprep.subr.mxu0 0.0
    %825 = vmatpush1.msra.mxu0 0.0
    %826 = vmatprep.subr.mxu0 0.0
    %827 = vmatpush1.msra.mxu0 0.0
    %828 = vmatprep.subr.mxu0 0.0
    %829 = vmatpush1.msra.mxu0 0.0
    %830 = vmatprep.subr.mxu0 0.0
    %831 = vmatpush1.msra.mxu0 0.0
    %832 = vmatprep.subr.mxu0 0.0
    %833 = vmatpush1.msra.mxu0 0.0
    %834 = vmatprep.subr.mxu0 0.0
    %835 = vmatpush1.msra.mxu0 0.0
    %836 = vmatprep.subr.mxu0 0.0
    %837 = vmatpush1.msra.mxu0 0.0
    %838 = vmatprep.subr.mxu0 0.0
    %839 = vmatpush1.msra.mxu0 0.0
    %840 = vmatprep.subr.mxu0 0.0
    %841 = vmatpush1.msra.mxu0 0.0
    %842 = vmatprep.subr.mxu0 0.0
    %843 = vmatpush1.msra.mxu0 0.0
    %844 = vmatprep.subr.mxu0 0.0
    %845 = vmatpush1.msra.mxu0 0.0
    %846 = vmatprep.subr.mxu0 0.0
    %847 = vmatpush1.msra.mxu0 0.0
    %848 = vmatprep.subr.mxu0 0.0
    %849 = vmatpush1.msra.mxu0 0.0
    %850 = vmatprep.subr.mxu0 0.0
    %851 = vmatpush1.msra.mxu0 0.0
    %852 = vmatprep.mubr.f32.mxu0 0.0
    %v853 = vand.u32 %v40, 4294901760
    %854 = vmatmul.mubr.f32.gmra.mrb[0].mxu0 %v853
    %v855 = vpop.f32.mrb[0].mxu0
    %v856 = vadd.f32 %v679, %v855
    %v857 = vpop.f32.mrb[0].mxu0
    %v858 = vadd.f32 %v681, %v857
    %859 = vmatprep.mubr.f32.mxu0 0.0
    %v860 = vand.u32 %v41, 4294901760
    %861 = vmatmul.mubr.f32.gmra.mrb[0].mxu0 %v860
    %v862 = vpop.f32.mrb[0].mxu0
    %v863 = vadd.f32 %v688, %v862
    %v864 = vpop.f32.mrb[0].mxu0
    %v865 = vadd.f32 %v690, %v864
    %866 = vdwg.mxu0
    %v867 = vand.u32 %v43, 4294901760
    %868 = vmatprep.subr.mxu0 %v867
    %v869 = vand.u32 %v42, 4294901760
    %870 = vmatpush1.msra.mxu0 %v869
    %v871 = vand.u32 %v45, 4294901760
    %872 = vmatprep.subr.mxu0 %v871
    %v873 = vand.u32 %v44, 4294901760
    %874 = vmatpush1.msra.mxu0 %v873
    %v875 = vand.u32 %v47, 4294901760
    %876 = vmatprep.subr.mxu0 %v875
    %v877 = vand.u32 %v46, 4294901760
    %878 = vmatpush1.msra.mxu0 %v877
    %v879 = vand.u32 %v49, 4294901760
    %880 = vmatprep.subr.mxu0 %v879
    %v881 = vand.u32 %v48, 4294901760
    %882 = vmatpush1.msra.mxu0 %v881
    %v883 = vand.u32 %v51, 4294901760
    %884 = vmatprep.subr.mxu0 %v883
    %v885 = vand.u32 %v50, 4294901760
    %886 = vmatpush1.msra.mxu0 %v885
    %v887 = vand.u32 %v53, 4294901760
    %888 = vmatprep.subr.mxu0 %v887
    %v889 = vand.u32 %v52, 4294901760
    %890 = vmatpush1.msra.mxu0 %v889
    %v891 = vand.u32 %v55, 4294901760
    %892 = vmatprep.subr.mxu0 %v891
    %v893 = vand.u32 %v54, 4294901760
    %894 = vmatpush1.msra.mxu0 %v893
    %v895 = vand.u32 %v57, 4294901760
    %896 = vmatprep.subr.mxu0 %v895
    %v897 = vand.u32 %v56, 4294901760
    %898 = vmatpush1.msra.mxu0 %v897
    %v899 = vand.u32 %v59, 4294901760
    %900 = vmatprep.subr.mxu0 %v899
    %v901 = vand.u32 %v58, 4294901760
    %902 = vmatpush1.msra.mxu0 %v901
    %v903 = vand.u32 %v61, 4294901760
    %904 = vmatprep.subr.mxu0 %v903
    %v905 = vand.u32 %v60, 4294901760
    %906 = vmatpush1.msra.mxu0 %v905
    %v907 = vand.u32 %v63, 4294901760
    %908 = vmatprep.subr.mxu0 %v907
    %v909 = vand.u32 %v62, 4294901760
    %910 = vmatpush1.msra.mxu0 %v909
    %v911 = vand.u32 %v65, 4294901760
    %912 = vmatprep.subr.mxu0 %v911
    %v913 = vand.u32 %v64, 4294901760
    %914 = vmatpush1.msra.mxu0 %v913
    %v915 = vand.u32 %v67, 4294901760
    %916 = vmatprep.subr.mxu0 %v915
    %v917 = vand.u32 %v66, 4294901760
    %918 = vmatpush1.msra.mxu0 %v917
    %v919 = vand.u32 %v69, 4294901760
    %920 = vmatprep.subr.mxu0 %v919
    %v921 = vand.u32 %v68, 4294901760
    %922 = vmatpush1.msra.mxu0 %v921
    %v923 = vand.u32 %v71, 4294901760
    %924 = vmatprep.subr.mxu0 %v923
    %v925 = vand.u32 %v70, 4294901760
    %926 = vmatpush1.msra.mxu0 %v925
    %v927 = vand.u32 %v73, 4294901760
    %928 = vmatprep.subr.mxu0 %v927
    %v929 = vand.u32 %v72, 4294901760
    %930 = vmatpush1.msra.mxu0 %v929
    %931 = vmatprep.subr.mxu0 0.0
    %932 = vmatpush1.msra.mxu0 0.0
    %933 = vmatprep.subr.mxu0 0.0
    %934 = vmatpush1.msra.mxu0 0.0
    %935 = vmatprep.subr.mxu0 0.0
    %936 = vmatpush1.msra.mxu0 0.0
    %937 = vmatprep.subr.mxu0 0.0
    %938 = vmatpush1.msra.mxu0 0.0
    %939 = vmatprep.subr.mxu0 0.0
    %940 = vmatpush1.msra.mxu0 0.0
    %941 = vmatprep.subr.mxu0 0.0
    %942 = vmatpush1.msra.mxu0 0.0
    %943 = vmatprep.subr.mxu0 0.0
    %944 = vmatpush1.msra.mxu0 0.0
    %945 = vmatprep.subr.mxu0 0.0
    %946 = vmatpush1.msra.mxu0 0.0
    %947 = vmatprep.subr.mxu0 0.0
    %948 = vmatpush1.msra.mxu0 0.0
    %949 = vmatprep.subr.mxu0 0.0
    %950 = vmatpush1.msra.mxu0 0.0
    %951 = vmatprep.subr.mxu0 0.0
    %952 = vmatpush1.msra.mxu0 0.0
    %953 = vmatprep.subr.mxu0 0.0
    %954 = vmatpush1.msra.mxu0 0.0
    %955 = vmatprep.subr.mxu0 0.0
    %956 = vmatpush1.msra.mxu0 0.0
    %957 = vmatprep.subr.mxu0 0.0
    %958 = vmatpush1.msra.mxu0 0.0
    %959 = vmatprep.subr.mxu0 0.0
    %960 = vmatpush1.msra.mxu0 0.0
    %961 = vmatprep.subr.mxu0 0.0
    %962 = vmatpush1.msra.mxu0 0.0
    %963 = vmatprep.mubr.f32.mxu0 0.0
    %v964 = vand.u32 %v40, 4294901760
    %965 = vmatmul.mubr.f32.gmra.mrb[0].mxu0 %v964
    %v966 = vpop.f32.mrb[0].mxu0
    %v967 = vadd.f32 %v856, %v966
    %v968 = vpop.f32.mrb[0].mxu0
    %v969 = vadd.f32 %v858, %v968
    %970 = vmatprep.mubr.f32.mxu0 0.0
    %v971 = vand.u32 %v41, 4294901760
    %972 = vmatmul.mubr.f32.gmra.mrb[0].mxu0 %v971
    %v973 = vpop.f32.mrb[0].mxu0
    %v974 = vadd.f32 %v863, %v973
    %v975 = vpop.f32.mrb[0].mxu0
    %v976 = vadd.f32 %v865, %v975
    %977 = vdwg.mxu0
    %978 = vst [vmem:[#allocation5] sm:$0xff] %v967
    %979 = vst [vmem:[#allocation5 + $0x8] sm:$0xff] %v969
    %980 = vst [vmem:[#allocation5 + $0x10] sm:$0xff] %v974
    %981 = vst [vmem:[#allocation5 + $0x18] sm:$0xff] %v976
    // Predicated region
    $region14: #{tpu_custom_call.1} parent=1 // pred_check
      _
    $region15: #{tpu_custom_call.1} parent=1 // pred_check_branch
      %983 = sbr.rel (0) target = $region17
    $region16: #{tpu_custom_call.1} parent=1 // pred_region
      %s985 = ssub.s32 512, 512
      %986 = vsyncadd [#allocation4], %s985
      %s987 = sshll.u32 [#allocation5], 4
      %s988 = int_to_ptr.vmem [resolvable:$true] %s987
      %993 = dma.vmem_to_hbm [thread:$0]  %s988, 512, %s2, [#allocation4], 256, 256, 16
    $region17: #{tpu_custom_call.1} parent=1 // pred_fallthru
      _
    // Predicated region
    $region18: #{tpu_custom_call.1} parent=1 // pred_check
      _
    $region19: #{tpu_custom_call.1} parent=1 // pred_check_branch
      %995 = sbr.rel (0) target = $region21
    $region20: #{tpu_custom_call.1} parent=1 // pred_region
      %996 = dma.done [#allocation4], 512
    $region21: #{tpu_custom_call.1} parent=1 // pred_fallthru
      _
    %997 = vsyncpa [#allocation3], 1
    %998 = vsyncpa [#allocation4], 1

</llo_original>
